<compile_context>
chip_gen: v7x
topology: tpu7x:2x2x1
jax: 0.10.0
libtpu: 0.0.40
codegen_flags: <defaults>
</compile_context>

<pallas_src>
import jax
import jax.numpy as jnp
from jax.experimental import pallas as pl
from jax.experimental.pallas import tpu as pltpu

LANE = 128     # vreg lane width (last dim)
SUBLANE = 8    # f32 sublane width (second-to-last dim)


def _round_up(n, m):
    return ((n + m - 1) // m) * m


def _sigmoid(z):
    # exp -> EUP, approx reciprocal -> EUP vrcp; bias/compare stay on the VPU.
    return pl.reciprocal(1.0 + jnp.exp(-z), approx=True)


def _discriminator_kernel(x_ref, w1_ref, b1_ref, w2_ref, b2_ref,
                          w3_ref, b3_ref, o_ref):
    cdt = w1_ref.dtype  # matmul input dtype (f32 or bf16); accumulate in f32

    # Layer 1: sigmoid(x @ W1 + b1)
    h = jnp.dot(x_ref[...], w1_ref[...], preferred_element_type=jnp.float32)
    h = _sigmoid(h + b1_ref[...])
    # Layer 2: sigmoid(h @ W2 + b2)
    h = jnp.dot(h.astype(cdt), w2_ref[...], preferred_element_type=jnp.float32)
    h = _sigmoid(h + b2_ref[...])
    # Layer 3: sigmoid(h @ W3 + b3)
    o = jnp.dot(h.astype(cdt), w3_ref[...], preferred_element_type=jnp.float32)
    o_ref[...] = _sigmoid(o + b3_ref[...]).astype(o_ref.dtype)


def discriminator_forward(x, params, *, batch_tile=256, compute_dtype=None,
                          vmem_limit_bytes=None):
    """Fused Discriminator forward.

    x:       (B, input_size) float32
    params:  dict with w1 (in,hid), b1 (1,hid), w2 (hid,hid), b2 (1,hid),
             w3 (hid,out), b3 (1,out)   (weights already transposed vs torch)
    compute_dtype: optional dtype for the matmul inputs (e.g. jnp.bfloat16 on
             v6e/v7x); accumulation and the bias/sigmoid math stay f32.
    """
    w1, b1 = params["w1"], params["b1"]
    w2, b2 = params["w2"], params["b2"]
    w3, b3 = params["w3"], params["b3"]

    B, in_size = x.shape
    hidden = w1.shape[1]
    out_size = w3.shape[1]

    cdt = jnp.dtype(compute_dtype) if compute_dtype is not None else x.dtype

    # ---- pad feature dims to the 128-lane width (exact, see header) --------
    Ip = _round_up(in_size, LANE)
    Hp = _round_up(hidden, LANE)
    Op = _round_up(out_size, LANE)

    def pad2(a, r, c):
        return jnp.pad(a, ((0, r - a.shape[0]), (0, c - a.shape[1])))

    w1p = pad2(w1, Ip, Hp).astype(cdt)
    w2p = pad2(w2, Hp, Hp).astype(cdt)
    w3p = pad2(w3, Hp, Op).astype(cdt)
    b1p = pad2(b1, 1, Hp).astype(jnp.float32)
    b2p = pad2(b2, 1, Hp).astype(jnp.float32)
    b3p = pad2(b3, 1, Op).astype(jnp.float32)

    # ---- batch tiling: big tile, cdiv + zero-pad rows, >=2 steps if possible
    B8 = _round_up(B, SUBLANE)
    tb = min(_round_up(batch_tile, SUBLANE), B8)
    if B8 // tb < 2 and B8 >= 2 * SUBLANE:
        tb = _round_up(pl.cdiv(B8, 2), SUBLANE)   # let v7x use both TCs
    Bp = _round_up(B, tb)
    grid = (Bp // tb,)

    xp = jnp.pad(x, ((0, Bp - B), (0, Ip - in_size))).astype(cdt)

    # ---- cost hint for XLA's scheduler --------------------------------------
    flops = 2 * Bp * (Ip * Hp + Hp * Hp + Hp * Op)
    transcendentals = Bp * (2 * Hp + Op)  # one exp (+EUP recip) per sigmoid elem
    bytes_accessed = (
        xp.size * xp.dtype.itemsize
        + sum(a.size * a.dtype.itemsize
              for a in (w1p, b1p, w2p, b2p, w3p, b3p))
        + Bp * Op * x.dtype.itemsize)
    cost = pl.CostEstimate(flops=flops, transcendentals=transcendentals,
                           bytes_accessed=bytes_accessed)

    cp_kwargs = dict(dimension_semantics=("parallel",))
    if vmem_limit_bytes is not None:
        cp_kwargs["vmem_limit_bytes"] = vmem_limit_bytes

    rowblk = lambda i: (i, 0)   # x / out: tile along the batch axis
    full = lambda i: (0, 0)     # weights / biases: same (only) block every step

    out = pl.pallas_call(
        _discriminator_kernel,
        out_shape=jax.ShapeDtypeStruct((Bp, Op), x.dtype),
        grid_spec=pltpu.PrefetchScalarGridSpec(
            num_scalar_prefetch=0,
            grid=grid,
            in_specs=[
                pl.BlockSpec((tb, Ip), rowblk),   # x
                pl.BlockSpec((Ip, Hp), full),     # w1
                pl.BlockSpec((1, Hp), full),      # b1
                pl.BlockSpec((Hp, Hp), full),     # w2
                pl.BlockSpec((1, Hp), full),      # b2
                pl.BlockSpec((Hp, Op), full),     # w3
                pl.BlockSpec((1, Op), full),      # b3
            ],
            out_specs=pl.BlockSpec((tb, Op), rowblk),
        ),
        compiler_params=pltpu.CompilerParams(**cp_kwargs),
        cost_estimate=cost,
    )(xp, w1p, b1p, w2p, b2p, w3p, b3p)

    return out[:B, :out_size]


def init_params(key, input_size, hidden_size, output_size):
    """Deterministic synthetic parameters (shapes match nn.Linear, transposed)."""
    ks = jax.random.split(key, 6)
    w1 = jax.random.normal(ks[0], (input_size, hidden_size), jnp.float32) * 0.1
    b1 = jax.random.normal(ks[1], (1, hidden_size), jnp.float32) * 0.1
    w2 = jax.random.normal(ks[2], (hidden_size, hidden_size), jnp.float32) * 0.1
    b2 = jax.random.normal(ks[3], (1, hidden_size), jnp.float32) * 0.1
    w3 = jax.random.normal(ks[4], (hidden_size, output_size), jnp.float32) * 0.1
    b3 = jax.random.normal(ks[5], (1, output_size), jnp.float32) * 0.1
    return dict(w1=w1, b1=b1, w2=w2, b2=b2, w3=w3, b3=b3)


def _reference_forward(x, p):
    f = jax.nn.sigmoid
    h = f(x @ p["w1"] + p["b1"])
    h = f(h @ p["w2"] + p["b2"])
    return f(h @ p["w3"] + p["b3"])


if __name__ == "__main__":
    key = jax.random.PRNGKey(0)
    k_x, k_p = jax.random.split(key)

    batch, input_size, hidden_size, output_size = 8, 16, 32, 1
    x = jax.random.normal(k_x, (batch, input_size), jnp.float32)
    params = init_params(k_p, input_size, hidden_size, output_size)

    ref = _reference_forward(x, params)

    # f32 path (exact semantics of the torch module; approx EUP reciprocal
    # in the sigmoid -> slightly relaxed tolerance).
    out = jax.block_until_ready(discriminator_forward(x, params))
    assert out.shape == (batch, output_size)
    assert jnp.allclose(out, ref, atol=5e-3, rtol=5e-3), "f32 kernel mismatch"

    # bf16-weights path (MXU-native on v6e/v7x); relaxed tolerance.
    out_bf16 = jax.block_until_ready(
        discriminator_forward(x, params, compute_dtype=jnp.bfloat16))
    assert out_bf16.shape == (batch, output_size)
    assert jnp.allclose(out_bf16, ref, atol=3e-2, rtol=3e-2), "bf16 kernel mismatch"

    print("KERNEL_OK")
</pallas_src>

<mosaic_0001>
module attributes {stable_mosaic.version = 11 : i64} {
  func.func @_discriminator_kernel(%arg0: i32, %arg1: memref<8x128xf32, #tpu.memory_space<vmem>>, %arg2: memref<128x128xf32, #tpu.memory_space<vmem>>, %arg3: memref<1x128xf32, #tpu.memory_space<vmem>>, %arg4: memref<128x128xf32, #tpu.memory_space<vmem>>, %arg5: memref<1x128xf32, #tpu.memory_space<vmem>>, %arg6: memref<128x128xf32, #tpu.memory_space<vmem>>, %arg7: memref<1x128xf32, #tpu.memory_space<vmem>>, %arg8: memref<8x128xf32, #tpu.memory_space<vmem>>) attributes {dimension_semantics = [#tpu.dimension_semantics<parallel>], iteration_bounds = array<i64: 1>, scalar_prefetch = 0 : i64, scratch_operands = 0 : i64, tpu.core_type = #tpu.core_type<tc>, window_params = [{transform_indices = @transform_0, window_bounds = array<i64: 8, 128>}, {pipeline_mode = #tpu.pipeline_mode<synchronous>, transform_indices = @transform_1, window_bounds = array<i64: 128, 128>}, {pipeline_mode = #tpu.pipeline_mode<synchronous>, transform_indices = @transform_2, window_bounds = array<i64: 1, 128>}, {pipeline_mode = #tpu.pipeline_mode<synchronous>, transform_indices = @transform_3, window_bounds = array<i64: 128, 128>}, {pipeline_mode = #tpu.pipeline_mode<synchronous>, transform_indices = @transform_4, window_bounds = array<i64: 1, 128>}, {pipeline_mode = #tpu.pipeline_mode<synchronous>, transform_indices = @transform_5, window_bounds = array<i64: 128, 128>}, {pipeline_mode = #tpu.pipeline_mode<synchronous>, transform_indices = @transform_6, window_bounds = array<i64: 1, 128>}, {transform_indices = @transform_7, window_bounds = array<i64: 8, 128>}]} {
    %c0 = arith.constant 0 : index
    %c0_0 = arith.constant 0 : index
    %0 = vector.load %arg1[%c0, %c0_0] : memref<8x128xf32, #tpu.memory_space<vmem>>, vector<8x128xf32>
    %c0_1 = arith.constant 0 : index
    %c0_2 = arith.constant 0 : index
    %1 = vector.load %arg2[%c0_1, %c0_2] : memref<128x128xf32, #tpu.memory_space<vmem>>, vector<128x128xf32>
    %cst = arith.constant dense<0.000000e+00> : vector<8x128xf32>
    %2 = tpu.matmul %0, %1, %cst {dimension_numbers = #tpu.dot_dimension_numbers<[1], [0], [0], [1], [0, 0, 1, 1], [], []>} : vector<8x128xf32>, vector<128x128xf32>, vector<8x128xf32> -> vector<8x128xf32>
    %c0_3 = arith.constant 0 : index
    %c0_4 = arith.constant 0 : index
    %3 = vector.load %arg3[%c0_3, %c0_4] : memref<1x128xf32, #tpu.memory_space<vmem>>, vector<1x128xf32>
    %4 = vector.broadcast %3 : vector<1x128xf32> to vector<8x128xf32>
    %5 = arith.addf %2, %4 : vector<8x128xf32>
    %cst_5 = arith.constant 0.000000e+00 : f32
    %6 = vector.broadcast %cst_5 : f32 to vector<8x128xf32>
    %7 = arith.subf %6, %5 : vector<8x128xf32>
    %8 = math.exp %7 : vector<8x128xf32>
    %cst_6 = arith.constant 1.000000e+00 : f32
    %9 = vector.broadcast %cst_6 : f32 to vector<8x128xf32>
    %10 = arith.addf %9, %8 : vector<8x128xf32>
    %11 = tpu.reciprocal %10 {approx = true} : vector<8x128xf32> -> vector<8x128xf32>
    %c0_7 = arith.constant 0 : index
    %c0_8 = arith.constant 0 : index
    %12 = vector.load %arg4[%c0_7, %c0_8] : memref<128x128xf32, #tpu.memory_space<vmem>>, vector<128x128xf32>
    %cst_9 = arith.constant dense<0.000000e+00> : vector<8x128xf32>
    %13 = tpu.matmul %11, %12, %cst_9 {dimension_numbers = #tpu.dot_dimension_numbers<[1], [0], [0], [1], [0, 0, 1, 1], [], []>} : vector<8x128xf32>, vector<128x128xf32>, vector<8x128xf32> -> vector<8x128xf32>
    %c0_10 = arith.constant 0 : index
    %c0_11 = arith.constant 0 : index
    %14 = vector.load %arg5[%c0_10, %c0_11] : memref<1x128xf32, #tpu.memory_space<vmem>>, vector<1x128xf32>
    %15 = vector.broadcast %14 : vector<1x128xf32> to vector<8x128xf32>
    %16 = arith.addf %13, %15 : vector<8x128xf32>
    %cst_12 = arith.constant 0.000000e+00 : f32
    %17 = vector.broadcast %cst_12 : f32 to vector<8x128xf32>
    %18 = arith.subf %17, %16 : vector<8x128xf32>
    %19 = math.exp %18 : vector<8x128xf32>
    %cst_13 = arith.constant 1.000000e+00 : f32
    %20 = vector.broadcast %cst_13 : f32 to vector<8x128xf32>
    %21 = arith.addf %20, %19 : vector<8x128xf32>
    %22 = tpu.reciprocal %21 {approx = true} : vector<8x128xf32> -> vector<8x128xf32>
    %c0_14 = arith.constant 0 : index
    %c0_15 = arith.constant 0 : index
    %23 = vector.load %arg6[%c0_14, %c0_15] : memref<128x128xf32, #tpu.memory_space<vmem>>, vector<128x128xf32>
    %cst_16 = arith.constant dense<0.000000e+00> : vector<8x128xf32>
    %24 = tpu.matmul %22, %23, %cst_16 {dimension_numbers = #tpu.dot_dimension_numbers<[1], [0], [0], [1], [0, 0, 1, 1], [], []>} : vector<8x128xf32>, vector<128x128xf32>, vector<8x128xf32> -> vector<8x128xf32>
    %c0_17 = arith.constant 0 : index
    %c0_18 = arith.constant 0 : index
    %25 = vector.load %arg7[%c0_17, %c0_18] : memref<1x128xf32, #tpu.memory_space<vmem>>, vector<1x128xf32>
    %26 = vector.broadcast %25 : vector<1x128xf32> to vector<8x128xf32>
    %27 = arith.addf %24, %26 : vector<8x128xf32>
    %cst_19 = arith.constant 0.000000e+00 : f32
    %28 = vector.broadcast %cst_19 : f32 to vector<8x128xf32>
    %29 = arith.subf %28, %27 : vector<8x128xf32>
    %30 = math.exp %29 : vector<8x128xf32>
    %cst_20 = arith.constant 1.000000e+00 : f32
    %31 = vector.broadcast %cst_20 : f32 to vector<8x128xf32>
    %32 = arith.addf %31, %30 : vector<8x128xf32>
    %33 = tpu.reciprocal %32 {approx = true} : vector<8x128xf32> -> vector<8x128xf32>
    %c0_21 = arith.constant 0 : index
    %c0_22 = arith.constant 0 : index
    %34 = vector.load %arg8[%c0_21, %c0_22] : memref<8x128xf32, #tpu.memory_space<vmem>>, vector<8x128xf32>
    tpu.vector_store %arg8[%c0_21, %c0_22], %33 {strides = array<i32>} : memref<8x128xf32, #tpu.memory_space<vmem>>, vector<8x128xf32>,
    return
  }
  func.func @transform_0(%arg0: i32) -> (i32, i32) {
    %c0_i32 = arith.constant 0 : i32
    %c0_i32_0 = arith.constant 0 : i32
    return %arg0, %c0_i32 : i32, i32
  }
  func.func @transform_1(%arg0: i32) -> (i32, i32) {
    %c0_i32 = arith.constant 0 : i32
    %c0_i32_0 = arith.constant 0 : i32
    %c0_i32_1 = arith.constant 0 : i32
    return %c0_i32, %c0_i32_0 : i32, i32
  }
  func.func @transform_2(%arg0: i32) -> (i32, i32) {
    %c0_i32 = arith.constant 0 : i32
    %c0_i32_0 = arith.constant 0 : i32
    %c0_i32_1 = arith.constant 0 : i32
    return %c0_i32, %c0_i32_0 : i32, i32
  }
  func.func @transform_3(%arg0: i32) -> (i32, i32) {
    %c0_i32 = arith.constant 0 : i32
    %c0_i32_0 = arith.constant 0 : i32
    %c0_i32_1 = arith.constant 0 : i32
    return %c0_i32, %c0_i32_0 : i32, i32
  }
  func.func @transform_4(%arg0: i32) -> (i32, i32) {
    %c0_i32 = arith.constant 0 : i32
    %c0_i32_0 = arith.constant 0 : i32
    %c0_i32_1 = arith.constant 0 : i32
    return %c0_i32, %c0_i32_0 : i32, i32
  }
  func.func @transform_5(%arg0: i32) -> (i32, i32) {
    %c0_i32 = arith.constant 0 : i32
    %c0_i32_0 = arith.constant 0 : i32
    %c0_i32_1 = arith.constant 0 : i32
    return %c0_i32, %c0_i32_0 : i32, i32
  }
  func.func @transform_6(%arg0: i32) -> (i32, i32) {
    %c0_i32 = arith.constant 0 : i32
    %c0_i32_0 = arith.constant 0 : i32
    %c0_i32_1 = arith.constant 0 : i32
    return %c0_i32, %c0_i32_0 : i32, i32
  }
  func.func @transform_7(%arg0: i32) -> (i32, i32) {
    %c0_i32 = arith.constant 0 : i32
    %c0_i32_0 = arith.constant 0 : i32
    return %arg0, %c0_i32 : i32, i32
  }
}

</mosaic_0001>

<llo_original>
// kernel: tpu_custom_call.1
$region0: #{tpu_custom_call.1}
  #allocation0 [shape = 'u32[]', space=smem, size = 0x4, offset = 0x4, fixed_abs, tag = 'smem constant byte address 0x4 - core index']
  #allocation1 [shape = 'u32[144,128]{1,0:T(1,128)}', space=vmem, size = 0x12000, scoped, tag = 'internal scratch']
  %s0 = inlined_call_operand.hbm [shape: f32[8,128], index: 0, kind: input, shape index: {}]
  %s1 = inlined_call_operand.hbm [shape: f32[128,128], index: 1, kind: input, shape index: {}]
  %s2 = inlined_call_operand.vmem [shape: f32[1,128], index: 2, kind: input, shape index: {}]
  %s3 = inlined_call_operand.hbm [shape: f32[128,128], index: 3, kind: input, shape index: {}]
  %s4 = inlined_call_operand.vmem [shape: f32[1,128], index: 4, kind: input, shape index: {}]
  %s5 = inlined_call_operand.hbm [shape: f32[128,128], index: 5, kind: input, shape index: {}]
  %s6 = inlined_call_operand.vmem [shape: f32[1,128], index: 6, kind: input, shape index: {}]
  %s7 = inlined_call_operand.hbm [shape: f32[8,128], index: 7, kind: output, shape index: {}]
  %s8 = sld [smem:[#allocation0]]
  $region54: #{tpu_custom_call.1} parent=0
    _
  %s10 = ssub.s32 1, %s8
  %s11 = scalar_select 0, %s10, %s8
  $region1: #{tpu_custom_call.1} parent=0
    #allocation2 [shape = 'u8[4096]{0}', space=vmem, size = 0x1000, scoped, tag = 'input window, operand 0, single buffered']
    #allocation3 [shape = 's32[1]{0}', space=sflag, size = 0x4, scoped, tag = 'scoped memory for tpu_custom_call.1']
    #allocation4 [shape = 's32[1]{0}', space=sflag, size = 0x4, scoped, tag = 'scoped memory for tpu_custom_call.1']
    #allocation5 [shape = 'u8[65536]{0}', space=vmem, size = 0x10000, scoped, tag = 'input window, operand 1, single buffered']
    #allocation6 [shape = 's32[1]{0}', space=sflag, size = 0x4, scoped, tag = 'scoped memory for tpu_custom_call.1']
    #allocation7 [shape = 'u8[65536]{0}', space=vmem, size = 0x10000, scoped, tag = 'input window, operand 3, single buffered']
    #allocation8 [shape = 'u8[65536]{0}', space=vmem, size = 0x10000, scoped, tag = 'input window, operand 5, single buffered']
    #allocation9 [shape = 's32[1]{0}', space=sflag, size = 0x4, scoped, tag = 'scoped memory for tpu_custom_call.1']
    #allocation10 [shape = 'u8[4096]{0}', space=vmem, size = 0x1000, scoped, tag = 'output window, operand 0, single buffered']
    %12 = vsyncpa [#allocation3], 0
    %13 = vsyncpa [#allocation6], 0
    %14 = vsyncpa [#allocation9], 0
    %15 = vsyncpa [#allocation4], 0
    // Predicated region
    $region2: #{tpu_custom_call.1} parent=1 // pred_check
      _
    $region3: #{tpu_custom_call.1} parent=1 // pred_check_branch
      %17 = sbr.rel (0) target = $region5
    $region4: #{tpu_custom_call.1} parent=1 // pred_region
      %s19 = ssub.s32 128, 128
      %20 = vsyncadd [#allocation3], %s19
      %s22 = sshll.u32 [#allocation2], 4
      %s23 = int_to_ptr.vmem [resolvable:$true] %s22
      %25 = dma.hbm_to_vmem [thread:$0]  %s0, 128, %s23, [#allocation3]
    $region5: #{tpu_custom_call.1} parent=1 // pred_fallthru
      _
    // Predicated region
    $region6: #{tpu_custom_call.1} parent=1 // pred_check
      _
    $region7: #{tpu_custom_call.1} parent=1 // pred_check_branch
      %27 = sbr.rel (0) target = $region9
    $region8: #{tpu_custom_call.1} parent=1 // pred_region
      %s29 = ssub.s32 2048, 2048
      %30 = vsyncadd [#allocation6], %s29
      %s31 = sshll.u32 [#allocation5], 4
      %s32 = int_to_ptr.vmem [resolvable:$true] %s31
      %37 = dma.hbm_to_vmem [thread:$0]  %s1, 2048, %s32, [#allocation6], 128, 128, 8
    $region9: #{tpu_custom_call.1} parent=1 // pred_fallthru
      _
    // Predicated region
    $region10: #{tpu_custom_call.1} parent=1 // pred_check
      _
    $region11: #{tpu_custom_call.1} parent=1 // pred_check_branch
      %39 = sbr.rel (0) target = $region13
    $region12: #{tpu_custom_call.1} parent=1 // pred_region
      _
    $region13: #{tpu_custom_call.1} parent=1 // pred_fallthru
      _
    // Predicated region
    $region14: #{tpu_custom_call.1} parent=1 // pred_check
      _
    $region15: #{tpu_custom_call.1} parent=1 // pred_check_branch
      %41 = sbr.rel (0) target = $region17
    $region16: #{tpu_custom_call.1} parent=1 // pred_region
      %s43 = ssub.s32 2048, 2048
      %44 = vsyncadd [#allocation6], %s43
      %s45 = sshll.u32 [#allocation7], 4
      %s46 = int_to_ptr.vmem [resolvable:$true] %s45
      %51 = dma.hbm_to_vmem [thread:$0]  %s3, 2048, %s46, [#allocation6], 128, 128, 8
    $region17: #{tpu_custom_call.1} parent=1 // pred_fallthru
      _
    // Predicated region
    $region18: #{tpu_custom_call.1} parent=1 // pred_check
      _
    $region19: #{tpu_custom_call.1} parent=1 // pred_check_branch
      %53 = sbr.rel (0) target = $region21
    $region20: #{tpu_custom_call.1} parent=1 // pred_region
      _
    $region21: #{tpu_custom_call.1} parent=1 // pred_fallthru
      _
    // Predicated region
    $region22: #{tpu_custom_call.1} parent=1 // pred_check
      _
    $region23: #{tpu_custom_call.1} parent=1 // pred_check_branch
      %55 = sbr.rel (0) target = $region25
    $region24: #{tpu_custom_call.1} parent=1 // pred_region
      %s57 = ssub.s32 2048, 2048
      %58 = vsyncadd [#allocation9], %s57
      %s59 = sshll.u32 [#allocation8], 4
      %s60 = int_to_ptr.vmem [resolvable:$true] %s59
      %65 = dma.hbm_to_vmem [thread:$0]  %s5, 2048, %s60, [#allocation9], 128, 128, 8
    $region25: #{tpu_custom_call.1} parent=1 // pred_fallthru
      _
    // Predicated region
    $region26: #{tpu_custom_call.1} parent=1 // pred_check
      _
    $region27: #{tpu_custom_call.1} parent=1 // pred_check_branch
      %67 = sbr.rel (0) target = $region29
    $region28: #{tpu_custom_call.1} parent=1 // pred_region
      _
    $region29: #{tpu_custom_call.1} parent=1 // pred_fallthru
      _
    // Predicated region
    $region30: #{tpu_custom_call.1} parent=1 // pred_check
      _
    $region31: #{tpu_custom_call.1} parent=1 // pred_check_branch
      %69 = sbr.rel (0) target = $region33
    $region32: #{tpu_custom_call.1} parent=1 // pred_region
      %70 = dma.done [#allocation3], 128
    $region33: #{tpu_custom_call.1} parent=1 // pred_fallthru
      _
    // Predicated region
    $region34: #{tpu_custom_call.1} parent=1 // pred_check
      _
    $region35: #{tpu_custom_call.1} parent=1 // pred_check_branch
      %72 = sbr.rel (0) target = $region37
    $region36: #{tpu_custom_call.1} parent=1 // pred_region
      %73 = dma.done [#allocation6], 2048
    $region37: #{tpu_custom_call.1} parent=1 // pred_fallthru
      _
    // Predicated region
    $region38: #{tpu_custom_call.1} parent=1 // pred_check
      _
    $region39: #{tpu_custom_call.1} parent=1 // pred_check_branch
      %75 = sbr.rel (0) target = $region41
    $region40: #{tpu_custom_call.1} parent=1 // pred_region
      %76 = dma.done [#allocation6], 2048
    $region41: #{tpu_custom_call.1} parent=1 // pred_fallthru
      _
    // Predicated region
    $region42: #{tpu_custom_call.1} parent=1 // pred_check
      _
    $region43: #{tpu_custom_call.1} parent=1 // pred_check_branch
      %78 = sbr.rel (0) target = $region45
    $region44: #{tpu_custom_call.1} parent=1 // pred_region
      %79 = dma.done [#allocation9], 2048
    $region45: #{tpu_custom_call.1} parent=1 // pred_fallthru
      _
    %v80 = vld [vmem:[#allocation2] sm:$0xff]
    %v81 = vld [vmem:[#allocation5] sm:$0xff]
    %v82 = vld [vmem:[#allocation5 + $0x8] sm:$0xff]
    %v83 = vld [vmem:[#allocation5 + $0x10] sm:$0xff]
    %v84 = vld [vmem:[#allocation5 + $0x18] sm:$0xff]
    %v85 = vld [vmem:[#allocation5 + $0x20] sm:$0xff]
    %v86 = vld [vmem:[#allocation5 + $0x28] sm:$0xff]
    %v87 = vld [vmem:[#allocation5 + $0x30] sm:$0xff]
    %v88 = vld [vmem:[#allocation5 + $0x38] sm:$0xff]
    %v89 = vld [vmem:[#allocation5 + $0x40] sm:$0xff]
    %v90 = vld [vmem:[#allocation5 + $0x48] sm:$0xff]
    %v91 = vld [vmem:[#allocation5 + $0x50] sm:$0xff]
    %v92 = vld [vmem:[#allocation5 + $0x58] sm:$0xff]
    %v93 = vld [vmem:[#allocation5 + $0x60] sm:$0xff]
    %v94 = vld [vmem:[#allocation5 + $0x68] sm:$0xff]
    %v95 = vld [vmem:[#allocation5 + $0x70] sm:$0xff]
    %v96 = vld [vmem:[#allocation5 + $0x78] sm:$0xff]
    %v97 = vld [vmem:[%s2] sm:$0x1]
    %v99 = vlaneseq
    %v100 = vshrl.u32 %v99, 7
    %v101 = vsub.s32 0, %v100
    %v102 = vrot.slane %v97, %v101
    %104 = vmatprep.subr.mxu0 0.0
    %105 = vmatpush1.msra.mxu0 %v81
    %106 = vmatprep.subr.mxu0 0.0
    %107 = vmatpush1.msra.mxu0 %v82
    %108 = vmatprep.subr.mxu0 0.0
    %109 = vmatpush1.msra.mxu0 %v83
    %110 = vmatprep.subr.mxu0 0.0
    %111 = vmatpush1.msra.mxu0 %v84
    %112 = vmatprep.subr.mxu0 0.0
    %113 = vmatpush1.msra.mxu0 %v85
    %114 = vmatprep.subr.mxu0 0.0
    %115 = vmatpush1.msra.mxu0 %v86
    %116 = vmatprep.subr.mxu0 0.0
    %117 = vmatpush1.msra.mxu0 %v87
    %118 = vmatprep.subr.mxu0 0.0
    %119 = vmatpush1.msra.mxu0 %v88
    %120 = vmatprep.subr.mxu0 0.0
    %121 = vmatpush1.msra.mxu0 %v89
    %122 = vmatprep.subr.mxu0 0.0
    %123 = vmatpush1.msra.mxu0 %v90
    %124 = vmatprep.subr.mxu0 0.0
    %125 = vmatpush1.msra.mxu0 %v91
    %126 = vmatprep.subr.mxu0 0.0
    %127 = vmatpush1.msra.mxu0 %v92
    %128 = vmatprep.subr.mxu0 0.0
    %129 = vmatpush1.msra.mxu0 %v93
    %130 = vmatprep.subr.mxu0 0.0
    %131 = vmatpush1.msra.mxu0 %v94
    %132 = vmatprep.subr.mxu0 0.0
    %133 = vmatpush1.msra.mxu0 %v95
    %134 = vmatprep.subr.mxu0 0.0
    %135 = vmatpush1.msra.mxu0 %v96
    %136 = vmatprep.subr.mxu0 0.0
    %137 = vmatpush1.msra.mxu0 0.0
    %138 = vmatprep.subr.mxu0 0.0
    %139 = vmatpush1.msra.mxu0 0.0
    %140 = vmatprep.subr.mxu0 0.0
    %141 = vmatpush1.msra.mxu0 0.0
    %142 = vmatprep.subr.mxu0 0.0
    %143 = vmatpush1.msra.mxu0 0.0
    %144 = vmatprep.subr.mxu0 0.0
    %145 = vmatpush1.msra.mxu0 0.0
    %146 = vmatprep.subr.mxu0 0.0
    %147 = vmatpush1.msra.mxu0 0.0
    %148 = vmatprep.subr.mxu0 0.0
    %149 = vmatpush1.msra.mxu0 0.0
    %150 = vmatprep.subr.mxu0 0.0
    %151 = vmatpush1.msra.mxu0 0.0
    %152 = vmatprep.subr.mxu0 0.0
    %153 = vmatpush1.msra.mxu0 0.0
    %154 = vmatprep.subr.mxu0 0.0
    %155 = vmatpush1.msra.mxu0 0.0
    %156 = vmatprep.subr.mxu0 0.0
    %157 = vmatpush1.msra.mxu0 0.0
    %158 = vmatprep.subr.mxu0 0.0
    %159 = vmatpush1.msra.mxu0 0.0
    %160 = vmatprep.subr.mxu0 0.0
    %161 = vmatpush1.msra.mxu0 0.0
    %162 = vmatprep.subr.mxu0 0.0
    %163 = vmatpush1.msra.mxu0 0.0
    %164 = vmatprep.subr.mxu0 0.0
    %165 = vmatpush1.msra.mxu0 0.0
    %166 = vmatprep.subr.mxu0 0.0
    %167 = vmatpush1.msra.mxu0 0.0
    %168 = vmatprep.mubr.f32.mxu0 0.0
    %169 = vmatmul.mubr.f32.gmra.mrb[0].mxu0 %v80
    %v170 = vpop.f32.mrb[0].mxu0
    %v171 = vadd.f32 %v102, %v170
    %v172 = vpop.f32.mrb[0].mxu0
    %173 = vdwg.mxu0
    %v174 = vsub.f32 0.0, %v171
    %v175 = vmul.f32 %v174, 1.442695
    %v176 = vpow.pop %v175
    %v177 = vadd.f32 %v176, 1.0
    %v178 = vrcp.pop %v177
    %v179 = vld [vmem:[#allocation7] sm:$0xff]
    %v180 = vld [vmem:[#allocation7 + $0x8] sm:$0xff]
    %v181 = vld [vmem:[#allocation7 + $0x10] sm:$0xff]
    %v182 = vld [vmem:[#allocation7 + $0x18] sm:$0xff]
    %v183 = vld [vmem:[#allocation7 + $0x20] sm:$0xff]
    %v184 = vld [vmem:[#allocation7 + $0x28] sm:$0xff]
    %v185 = vld [vmem:[#allocation7 + $0x30] sm:$0xff]
    %v186 = vld [vmem:[#allocation7 + $0x38] sm:$0xff]
    %v187 = vld [vmem:[#allocation7 + $0x40] sm:$0xff]
    %v188 = vld [vmem:[#allocation7 + $0x48] sm:$0xff]
    %v189 = vld [vmem:[#allocation7 + $0x50] sm:$0xff]
    %v190 = vld [vmem:[#allocation7 + $0x58] sm:$0xff]
    %v191 = vld [vmem:[#allocation7 + $0x60] sm:$0xff]
    %v192 = vld [vmem:[#allocation7 + $0x68] sm:$0xff]
    %v193 = vld [vmem:[#allocation7 + $0x70] sm:$0xff]
    %v194 = vld [vmem:[#allocation7 + $0x78] sm:$0xff]
    %v195 = vld [vmem:[%s4] sm:$0x1]
    %v197 = vlaneseq
    %v198 = vshrl.u32 %v197, 7
    %v199 = vsub.s32 0, %v198
    %v200 = vrot.slane %v195, %v199
    %202 = vmatprep.subr.mxu0 0.0
    %203 = vmatpush1.msra.mxu0 %v179
    %204 = vmatprep.subr.mxu0 0.0
    %205 = vmatpush1.msra.mxu0 %v180
    %206 = vmatprep.subr.mxu0 0.0
    %207 = vmatpush1.msra.mxu0 %v181
    %208 = vmatprep.subr.mxu0 0.0
    %209 = vmatpush1.msra.mxu0 %v182
    %210 = vmatprep.subr.mxu0 0.0
    %211 = vmatpush1.msra.mxu0 %v183
    %212 = vmatprep.subr.mxu0 0.0
    %213 = vmatpush1.msra.mxu0 %v184
    %214 = vmatprep.subr.mxu0 0.0
    %215 = vmatpush1.msra.mxu0 %v185
    %216 = vmatprep.subr.mxu0 0.0
    %217 = vmatpush1.msra.mxu0 %v186
    %218 = vmatprep.subr.mxu0 0.0
    %219 = vmatpush1.msra.mxu0 %v187
    %220 = vmatprep.subr.mxu0 0.0
    %221 = vmatpush1.msra.mxu0 %v188
    %222 = vmatprep.subr.mxu0 0.0
    %223 = vmatpush1.msra.mxu0 %v189
    %224 = vmatprep.subr.mxu0 0.0
    %225 = vmatpush1.msra.mxu0 %v190
    %226 = vmatprep.subr.mxu0 0.0
    %227 = vmatpush1.msra.mxu0 %v191
    %228 = vmatprep.subr.mxu0 0.0
    %229 = vmatpush1.msra.mxu0 %v192
    %230 = vmatprep.subr.mxu0 0.0
    %231 = vmatpush1.msra.mxu0 %v193
    %232 = vmatprep.subr.mxu0 0.0
    %233 = vmatpush1.msra.mxu0 %v194
    %234 = vmatprep.subr.mxu0 0.0
    %235 = vmatpush1.msra.mxu0 0.0
    %236 = vmatprep.subr.mxu0 0.0
    %237 = vmatpush1.msra.mxu0 0.0
    %238 = vmatprep.subr.mxu0 0.0
    %239 = vmatpush1.msra.mxu0 0.0
    %240 = vmatprep.subr.mxu0 0.0
    %241 = vmatpush1.msra.mxu0 0.0
    %242 = vmatprep.subr.mxu0 0.0
    %243 = vmatpush1.msra.mxu0 0.0
    %244 = vmatprep.subr.mxu0 0.0
    %245 = vmatpush1.msra.mxu0 0.0
    %246 = vmatprep.subr.mxu0 0.0
    %247 = vmatpush1.msra.mxu0 0.0
    %248 = vmatprep.subr.mxu0 0.0
    %249 = vmatpush1.msra.mxu0 0.0
    %250 = vmatprep.subr.mxu0 0.0
    %251 = vmatpush1.msra.mxu0 0.0
    %252 = vmatprep.subr.mxu0 0.0
    %253 = vmatpush1.msra.mxu0 0.0
    %254 = vmatprep.subr.mxu0 0.0
    %255 = vmatpush1.msra.mxu0 0.0
    %256 = vmatprep.subr.mxu0 0.0
    %257 = vmatpush1.msra.mxu0 0.0
    %258 = vmatprep.subr.mxu0 0.0
    %259 = vmatpush1.msra.mxu0 0.0
    %260 = vmatprep.subr.mxu0 0.0
    %261 = vmatpush1.msra.mxu0 0.0
    %262 = vmatprep.subr.mxu0 0.0
    %263 = vmatpush1.msra.mxu0 0.0
    %264 = vmatprep.subr.mxu0 0.0
    %265 = vmatpush1.msra.mxu0 0.0
    %266 = vmatprep.mubr.f32.mxu0 0.0
    %267 = vmatmul.mubr.f32.gmra.mrb[0].mxu0 %v178
    %v268 = vpop.f32.mrb[0].mxu0
    %v269 = vadd.f32 %v200, %v268
    %v270 = vpop.f32.mrb[0].mxu0
    %271 = vdwg.mxu0
    %v272 = vsub.f32 0.0, %v269
    %v273 = vmul.f32 %v272, 1.442695
    %v274 = vpow.pop %v273
    %v275 = vadd.f32 %v274, 1.0
    %v276 = vrcp.pop %v275
    %v277 = vld [vmem:[#allocation8] sm:$0xff]
    %v278 = vld [vmem:[#allocation8 + $0x8] sm:$0xff]
    %v279 = vld [vmem:[#allocation8 + $0x10] sm:$0xff]
    %v280 = vld [vmem:[#allocation8 + $0x18] sm:$0xff]
    %v281 = vld [vmem:[#allocation8 + $0x20] sm:$0xff]
    %v282 = vld [vmem:[#allocation8 + $0x28] sm:$0xff]
    %v283 = vld [vmem:[#allocation8 + $0x30] sm:$0xff]
    %v284 = vld [vmem:[#allocation8 + $0x38] sm:$0xff]
    %v285 = vld [vmem:[#allocation8 + $0x40] sm:$0xff]
    %v286 = vld [vmem:[#allocation8 + $0x48] sm:$0xff]
    %v287 = vld [vmem:[#allocation8 + $0x50] sm:$0xff]
    %v288 = vld [vmem:[#allocation8 + $0x58] sm:$0xff]
    %v289 = vld [vmem:[#allocation8 + $0x60] sm:$0xff]
    %v290 = vld [vmem:[#allocation8 + $0x68] sm:$0xff]
    %v291 = vld [vmem:[#allocation8 + $0x70] sm:$0xff]
    %v292 = vld [vmem:[#allocation8 + $0x78] sm:$0xff]
    %v293 = vld [vmem:[%s6] sm:$0x1]
    %v295 = vlaneseq
    %v296 = vshrl.u32 %v295, 7
    %v297 = vsub.s32 0, %v296
    %v298 = vrot.slane %v293, %v297
    %300 = vmatprep.subr.mxu0 0.0
    %301 = vmatpush1.msra.mxu0 %v277
    %302 = vmatprep.subr.mxu0 0.0
    %303 = vmatpush1.msra.mxu0 %v278
    %304 = vmatprep.subr.mxu0 0.0
    %305 = vmatpush1.msra.mxu0 %v279
    %306 = vmatprep.subr.mxu0 0.0
    %307 = vmatpush1.msra.mxu0 %v280
    %308 = vmatprep.subr.mxu0 0.0
    %309 = vmatpush1.msra.mxu0 %v281
    %310 = vmatprep.subr.mxu0 0.0
    %311 = vmatpush1.msra.mxu0 %v282
    %312 = vmatprep.subr.mxu0 0.0
    %313 = vmatpush1.msra.mxu0 %v283
    %314 = vmatprep.subr.mxu0 0.0
    %315 = vmatpush1.msra.mxu0 %v284
    %316 = vmatprep.subr.mxu0 0.0
    %317 = vmatpush1.msra.mxu0 %v285
    %318 = vmatprep.subr.mxu0 0.0
    %319 = vmatpush1.msra.mxu0 %v286
    %320 = vmatprep.subr.mxu0 0.0
    %321 = vmatpush1.msra.mxu0 %v287
    %322 = vmatprep.subr.mxu0 0.0
    %323 = vmatpush1.msra.mxu0 %v288
    %324 = vmatprep.subr.mxu0 0.0
    %325 = vmatpush1.msra.mxu0 %v289
    %326 = vmatprep.subr.mxu0 0.0
    %327 = vmatpush1.msra.mxu0 %v290
    %328 = vmatprep.subr.mxu0 0.0
    %329 = vmatpush1.msra.mxu0 %v291
    %330 = vmatprep.subr.mxu0 0.0
    %331 = vmatpush1.msra.mxu0 %v292
    %332 = vmatprep.subr.mxu0 0.0
    %333 = vmatpush1.msra.mxu0 0.0
    %334 = vmatprep.subr.mxu0 0.0
    %335 = vmatpush1.msra.mxu0 0.0
    %336 = vmatprep.subr.mxu0 0.0
    %337 = vmatpush1.msra.mxu0 0.0
    %338 = vmatprep.subr.mxu0 0.0
    %339 = vmatpush1.msra.mxu0 0.0
    %340 = vmatprep.subr.mxu0 0.0
    %341 = vmatpush1.msra.mxu0 0.0
    %342 = vmatprep.subr.mxu0 0.0
    %343 = vmatpush1.msra.mxu0 0.0
    %344 = vmatprep.subr.mxu0 0.0
    %345 = vmatpush1.msra.mxu0 0.0
    %346 = vmatprep.subr.mxu0 0.0
    %347 = vmatpush1.msra.mxu0 0.0
    %348 = vmatprep.subr.mxu0 0.0
    %349 = vmatpush1.msra.mxu0 0.0
    %350 = vmatprep.subr.mxu0 0.0
    %351 = vmatpush1.msra.mxu0 0.0
    %352 = vmatprep.subr.mxu0 0.0
    %353 = vmatpush1.msra.mxu0 0.0
    %354 = vmatprep.subr.mxu0 0.0
    %355 = vmatpush1.msra.mxu0 0.0
    %356 = vmatprep.subr.mxu0 0.0
    %357 = vmatpush1.msra.mxu0 0.0
    %358 = vmatprep.subr.mxu0 0.0
    %359 = vmatpush1.msra.mxu0 0.0
    %360 = vmatprep.subr.mxu0 0.0
    %361 = vmatpush1.msra.mxu0 0.0
    %362 = vmatprep.subr.mxu0 0.0
    %363 = vmatpush1.msra.mxu0 0.0
    %364 = vmatprep.mubr.f32.mxu0 0.0
    %365 = vmatmul.mubr.f32.gmra.mrb[0].mxu0 %v276
    %v366 = vpop.f32.mrb[0].mxu0
    %v367 = vadd.f32 %v298, %v366
    %v368 = vpop.f32.mrb[0].mxu0
    %369 = vdwg.mxu0
    %v370 = vsub.f32 0.0, %v367
    %v371 = vmul.f32 %v370, 1.442695
    %v372 = vpow.pop %v371
    %v373 = vadd.f32 %v372, 1.0
    %v374 = vrcp.pop %v373
    %375 = vst [vmem:[#allocation10] sm:$0xff] %v374
    // Predicated region
    $region46: #{tpu_custom_call.1} parent=1 // pred_check
      _
    $region47: #{tpu_custom_call.1} parent=1 // pred_check_branch
      %377 = sbr.rel (0) target = $region49
    $region48: #{tpu_custom_call.1} parent=1 // pred_region
      %s379 = ssub.s32 128, 128
      %380 = vsyncadd [#allocation4], %s379
      %s382 = sshll.u32 [#allocation10], 4
      %s383 = int_to_ptr.vmem [resolvable:$true] %s382
      %385 = dma.vmem_to_hbm [thread:$0]  %s383, 128, %s7, [#allocation4]
    $region49: #{tpu_custom_call.1} parent=1 // pred_fallthru
      _
    // Predicated region
    $region50: #{tpu_custom_call.1} parent=1 // pred_check
      _
    $region51: #{tpu_custom_call.1} parent=1 // pred_check_branch
      %387 = sbr.rel (0) target = $region53
    $region52: #{tpu_custom_call.1} parent=1 // pred_region
      %388 = dma.done [#allocation4], 128
    $region53: #{tpu_custom_call.1} parent=1 // pred_fallthru
      _
    %389 = vsyncpa [#allocation3], 1
    %390 = vsyncpa [#allocation6], 1
    %391 = vsyncpa [#allocation9], 1
    %392 = vsyncpa [#allocation4], 1

</llo_original>
